<compile_context>
chip_gen: v6e
topology: v6e:2x2x1
jax: 0.10.0
libtpu: 0.0.40
codegen_flags: <defaults>
</compile_context>

<pallas_src>
import jax
import jax.numpy as jnp
from jax import lax
from jax.experimental import pallas as pl
from jax.experimental.pallas import tpu as pltpu


def _cdiv(a, b):
    return -(-a // b)


# ----------------------------- kernel ---------------------------------------


def prenorm_kernel(x_ref, w_ref, b_ref, o_ref):
    # x_ref: (B_blk, C, TL)   w_ref: (C_out, C)  (g*sqrt(C) pre-folded, MXU dtype)
    # b_ref: (C_out, 1) f32   o_ref: (B_blk, C_out, TL)
    b_blk = x_ref.shape[0]
    w = w_ref[...]                                            # resident weight
    bias = b_ref[...]                                         # (C_out, 1)
    for bi in range(b_blk):                                   # trace-time unroll
        x = x_ref[bi]                                         # (C, TL)
        xf = x.astype(jnp.float32)
        sumsq = jnp.sum(xf * xf, axis=0, keepdims=True)       # (1, TL)  XLU reduce
        # 1 / max(||x||, 1e-12) == rsqrt(max(sumsq, 1e-24))   (sqrt is monotone)
        inv = lax.rsqrt(jnp.maximum(sumsq, 1e-24))            # (1, TL)  EUP
        # Scale-after-matmul: inv is per-lane/position, commutes with the C-contraction.
        y = jnp.dot(w, x.astype(w.dtype),                     # (C_out, TL)  MXU
                    preferred_element_type=jnp.float32)
        o_ref[bi] = (y * inv + bias).astype(o_ref.dtype)


# ----------------------------- tiling ----------------------------------------


def _vmem_budget():
    try:
        info = pltpu.get_tpu_info()
        cap = int(getattr(info, "vmem_capacity_bytes", 64 << 20))
    except Exception:                      # no TPU info available: assume v7x (64 MiB)
        cap = 64 << 20
    # <= half of physical VMEM, never above 48 MiB (leaves headroom on v7x's 64 MiB).
    return min(cap // 2, 48 << 20), cap


def _vmem_need(b_blk, c, c_out, t_l, in_b, out_b, w_b):
    x_tiles = 2 * b_blk * c * t_l * in_b              # double-buffered input tile
    o_tiles = 2 * b_blk * c_out * t_l * out_b         # double-buffered output tile
    weights = 2 * (c_out * c * w_b + c_out * 4)       # resident weight + bias
    temps = b_blk * (c + 2 * c_out) * t_l * 4         # x*x, f32 acc, scaled output
    return x_tiles + o_tiles + weights + temps


def _select_tiles(B, C, C_out, L, in_b, out_b, w_b, budget):
    L128 = 128 * _cdiv(L, 128)
    # Largest lane-dense tile (multiple of 128) that fits the budget at b_blk=1.
    tile_l = 128
    while tile_l < L128:
        cand = min(tile_l * 2, L128)
        if _vmem_need(1, C, C_out, cand, in_b, out_b, w_b) <= budget:
            tile_l = cand
        else:
            break
    grid_l = _cdiv(L, tile_l)
    # Block the batch while steps are too small to amortize the ~0.35us/step
    # overhead (target ~2 MB HBM traffic per step), keeping >= 2 grid steps.
    b_blk = 1
    while (B % (b_blk * 2) == 0
           and (B // (b_blk * 2)) * grid_l >= 2
           and _vmem_need(b_blk * 2, C, C_out, tile_l, in_b, out_b, w_b) <= budget
           and b_blk * tile_l * (C * in_b + C_out * out_b) < (2 << 20)):
        b_blk *= 2
    # v7x has 2 TensorCores: avoid a 1-step grid when the problem fits one tile.
    if (B // b_blk) * grid_l == 1 and tile_l > 128:
        tile_l = 128 * _cdiv(_cdiv(L, 2), 128)
        grid_l = _cdiv(L, tile_l)
    return b_blk, tile_l, grid_l


# ----------------------------- wrapper ----------------------------------------


def prenorm_forward(x_ncl, g, w, b, *, matmul_dtype=jnp.bfloat16, out_dtype=None):
    """PreNorm(dim, Conv1d(dim, dim, 1)).forward.

    x_ncl: (B, C, L) (PyTorch layout). g: (1, C, 1). w: (C_out, C). b: (C_out,).
    Returns (B, C_out, L) in out_dtype (defaults to x dtype).
    """
    B, C, L = x_ncl.shape
    C_out = w.shape[0]
    out_dtype = x_ncl.dtype if out_dtype is None else out_dtype

    # One-time constant fold: w_fused[o, i] = w[o, i] * g[i] * sqrt(C), cast once
    # to the MXU operand dtype. Norm math / bias / accumulation stay f32.
    w_fused = (w.astype(jnp.float32)
               * (g.reshape(1, C).astype(jnp.float32) * (float(C) ** 0.5))
               ).astype(matmul_dtype)
    b2 = b.reshape(C_out, 1).astype(jnp.float32)

    in_b = jnp.dtype(x_ncl.dtype).itemsize
    out_b = jnp.dtype(out_dtype).itemsize
    w_b = jnp.dtype(matmul_dtype).itemsize

    budget, cap = _vmem_budget()
    b_blk, tile_l, grid_l = _select_tiles(B, C, C_out, L, in_b, out_b, w_b, budget)

    # Lane-dense output tiles: pad L up to a whole number of 128-multiple tiles.
    # Zero-padded columns produce only bias in the (sliced-off) pad region (no NaNs:
    # dot(w, 0) = 0, 0 * inv = 0).
    L_pad = tile_l * grid_l
    x_in = x_ncl if L_pad == L else jnp.pad(x_ncl, ((0, 0), (0, 0), (0, L_pad - L)))

    need = _vmem_need(b_blk, C, C_out, tile_l, in_b, out_b, w_b)
    vmem_limit = int(min(cap, max(need + (8 << 20), 32 << 20)))

    cost = pl.CostEstimate(
        flops=2 * B * C * C_out * L_pad,
        transcendentals=0,
        bytes_accessed=B * L_pad * (C * in_b + C_out * out_b) + C * C_out * w_b + C_out * 4,
    )

    out = pl.pallas_call(
        prenorm_kernel,
        out_shape=jax.ShapeDtypeStruct((B, C_out, L_pad), out_dtype),
        grid_spec=pltpu.PrefetchScalarGridSpec(
            num_scalar_prefetch=0,
            grid=(B // b_blk, grid_l),
            in_specs=[
                pl.BlockSpec((b_blk, C, tile_l), lambda bi, li: (bi, 0, li)),  # x tile
                pl.BlockSpec((C_out, C), lambda bi, li: (0, 0)),               # weight (resident)
                pl.BlockSpec((C_out, 1), lambda bi, li: (0, 0)),               # bias   (resident)
            ],
            out_specs=pl.BlockSpec((b_blk, C_out, tile_l), lambda bi, li: (bi, 0, li)),
        ),
        compiler_params=pltpu.CompilerParams(
            dimension_semantics=("parallel", "parallel"),
            vmem_limit_bytes=vmem_limit,
        ),
        cost_estimate=cost,
    )(x_in, w_fused, b2)

    return out if L_pad == L else out[:, :, :L]


# ----------------------------- reference & test --------------------------------


def prenorm_reference(x_ncl, g, w, b):
    """Pure-JAX reference mirroring the PyTorch module."""
    C = x_ncl.shape[1]
    norm = jnp.sqrt(jnp.sum(x_ncl * x_ncl, axis=1, keepdims=True))
    normed = x_ncl / jnp.maximum(norm, 1e-12)
    normed = normed * g * (float(C) ** 0.5)                 # g broadcasts (1,C,1)
    return jnp.einsum("oi,bil->bol", w, normed) + b[None, :, None]


if __name__ == "__main__":
    B, C, L = 2, 32, 256                                    # small (batch, dim, length)

    key = jax.random.PRNGKey(0)
    kx, kw, kb, kg = jax.random.split(key, 4)

    x = jax.random.normal(kx, (B, C, L), dtype=jnp.float32)  # PyTorch (B, C, L) input
    g = 1.0 + 0.1 * jax.random.normal(kg, (1, C, 1), dtype=jnp.float32)
    w = jax.random.normal(kw, (C, C), dtype=jnp.float32) * 0.1  # fn = Conv1d(C, C, 1) weight
    b = jax.random.normal(kb, (C,), dtype=jnp.float32) * 0.1    # fn bias

    ref = prenorm_reference(x, g, w, b)

    # Exact-precision path (f32 MXU operands): tight tolerance.
    out_f32 = jax.block_until_ready(prenorm_forward(x, g, w, b, matmul_dtype=jnp.float32))
    assert out_f32.shape == (B, C, L)
    assert jnp.allclose(out_f32, ref, atol=2e-5, rtol=2e-5), "f32 path mismatch"

    # Default perf path (bf16 MXU operands, f32 norm/accumulate): bf16-level tolerance.
    out_bf16 = jax.block_until_ready(prenorm_forward(x, g, w, b))
    assert out_bf16.shape == (B, C, L)
    assert jnp.allclose(out_bf16, ref, atol=5e-2, rtol=5e-2), "bf16 path mismatch"

    # Non-128-multiple length exercises the lane-padding path.
    x2 = jax.random.normal(kx, (B, C, 200), dtype=jnp.float32)
    ref2 = prenorm_reference(x2, g, w, b)
    out2 = jax.block_until_ready(prenorm_forward(x2, g, w, b, matmul_dtype=jnp.float32))
    assert out2.shape == (B, C, 200)
    assert jnp.allclose(out2, ref2, atol=2e-5, rtol=2e-5), "padded-L path mismatch"

    # Larger batch exercises the batch-blocked (B_blk > 1) kernel path.
    x3 = jax.random.normal(kw, (8, C, L), dtype=jnp.float32)
    ref3 = prenorm_reference(x3, g, w, b)
    out3 = jax.block_until_ready(prenorm_forward(x3, g, w, b, matmul_dtype=jnp.float32))
    assert out3.shape == (8, C, L)
    assert jnp.allclose(out3, ref3, atol=2e-5, rtol=2e-5), "batch-blocked path mismatch"

    print("KERNEL_OK")
</pallas_src>

<mosaic_0001>
module attributes {stable_mosaic.version = 11 : i64} {
  func.func @prenorm_kernel(%arg0: i32, %arg1: i32, %arg2: memref<1x32x256xf32, #tpu.memory_space<vmem>>, %arg3: memref<32x32xf32, #tpu.memory_space<vmem>>, %arg4: memref<32x1xf32, #tpu.memory_space<vmem>>, %arg5: memref<1x32x256xf32, #tpu.memory_space<vmem>>) attributes {dimension_semantics = [#tpu.dimension_semantics<parallel>, #tpu.dimension_semantics<parallel>], iteration_bounds = array<i64: 2, 1>, scalar_prefetch = 0 : i64, scratch_operands = 0 : i64, tpu.core_type = #tpu.core_type<tc>, window_params = [{transform_indices = @transform_0, window_bounds = array<i64: 1, 32, 256>}, {pipeline_mode = #tpu.pipeline_mode<synchronous>, transform_indices = @transform_1, window_bounds = array<i64: 32, 32>}, {pipeline_mode = #tpu.pipeline_mode<synchronous>, transform_indices = @transform_2, window_bounds = array<i64: 32, 1>}, {transform_indices = @transform_3, window_bounds = array<i64: 1, 32, 256>}]} {
    %c0 = arith.constant 0 : index
    %c0_0 = arith.constant 0 : index
    %0 = vector.load %arg3[%c0, %c0_0] : memref<32x32xf32, #tpu.memory_space<vmem>>, vector<32x32xf32>
    %c0_1 = arith.constant 0 : index
    %c0_2 = arith.constant 0 : index
    %1 = vector.load %arg4[%c0_1, %c0_2] : memref<32x1xf32, #tpu.memory_space<vmem>>, vector<32x1xf32>
    %c0_3 = arith.constant 0 : index
    %c0_4 = arith.constant 0 : index
    %c0_5 = arith.constant 0 : index
    %2 = vector.load %arg2[%c0_3, %c0_4, %c0_5] : memref<1x32x256xf32, #tpu.memory_space<vmem>>, vector<1x32x256xf32>
    %3 = vector.shape_cast %2 : vector<1x32x256xf32> to vector<32x256xf32>
    %4 = arith.mulf %3, %3 : vector<32x256xf32>
    %cst = arith.constant dense<0.000000e+00> : vector<256xf32>
    %5 = vector.multi_reduction <add>, %4, %cst [0] : vector<32x256xf32> to vector<256xf32>
    %6 = vector.shape_cast %5 : vector<256xf32> to vector<1x256xf32>
    %cst_6 = arith.constant 1.000000e-24 : f32
    %7 = vector.broadcast %cst_6 : f32 to vector<1x256xf32>
    %8 = arith.maximumf %6, %7 : vector<1x256xf32>
    %9 = math.rsqrt %8 : vector<1x256xf32>
    %cst_7 = arith.constant dense<0.000000e+00> : vector<32x256xf32>
    %10 = tpu.matmul %0, %3, %cst_7 {dimension_numbers = #tpu.dot_dimension_numbers<[1], [0], [0], [1], [0, 0, 1, 1], [], []>} : vector<32x32xf32>, vector<32x256xf32>, vector<32x256xf32> -> vector<32x256xf32>
    %11 = vector.broadcast %9 : vector<1x256xf32> to vector<32x256xf32>
    %12 = arith.mulf %10, %11 : vector<32x256xf32>
    %13 = vector.broadcast %1 : vector<32x1xf32> to vector<32x256xf32>
    %14 = arith.addf %12, %13 : vector<32x256xf32>
    %c0_8 = arith.constant 0 : index
    %c0_9 = arith.constant 0 : index
    %c0_10 = arith.constant 0 : index
    %15 = vector.load %arg5[%c0_8, %c0_9, %c0_10] : memref<1x32x256xf32, #tpu.memory_space<vmem>>, vector<1x32x256xf32>
    %16 = vector.shape_cast %15 : vector<1x32x256xf32> to vector<32x256xf32>
    %17 = vector.shape_cast %14 : vector<32x256xf32> to vector<1x32x256xf32>
    tpu.vector_store %arg5[%c0_8, %c0_9, %c0_10], %17 {strides = array<i32>} : memref<1x32x256xf32, #tpu.memory_space<vmem>>, vector<1x32x256xf32>,
    return
  }
  func.func @transform_0(%arg0: i32, %arg1: i32) -> (i32, i32, i32) {
    %c0_i32 = arith.constant 0 : i32
    %c0_i32_0 = arith.constant 0 : i32
    return %arg0, %c0_i32, %arg1 : i32, i32, i32
  }
  func.func @transform_1(%arg0: i32, %arg1: i32) -> (i32, i32) {
    %c0_i32 = arith.constant 0 : i32
    %c0_i32_0 = arith.constant 0 : i32
    %c0_i32_1 = arith.constant 0 : i32
    return %c0_i32, %c0_i32_0 : i32, i32
  }
  func.func @transform_2(%arg0: i32, %arg1: i32) -> (i32, i32) {
    %c0_i32 = arith.constant 0 : i32
    %c0_i32_0 = arith.constant 0 : i32
    %c0_i32_1 = arith.constant 0 : i32
    return %c0_i32, %c0_i32_0 : i32, i32
  }
  func.func @transform_3(%arg0: i32, %arg1: i32) -> (i32, i32, i32) {
    %c0_i32 = arith.constant 0 : i32
    %c0_i32_0 = arith.constant 0 : i32
    return %arg0, %c0_i32, %arg1 : i32, i32, i32
  }
}

</mosaic_0001>

<llo_original>
// kernel: tpu_custom_call.1
$region0: #{tpu_custom_call.1}
  #allocation0 [shape = 'u32[]', space=smem, size = 0x4, offset = 0x4, fixed_abs, tag = 'smem constant byte address 0x4 - core index']
  #allocation1 [shape = 'u32[144,128]{1,0:T(1,128)}', space=vmem, size = 0x12000, scoped, tag = 'internal scratch']
  %s0 = inlined_call_operand.hbm [shape: f32[2,32,256], index: 0, kind: input, shape index: {}]
  %s1 = inlined_call_operand.vmem [shape: f32[32,32], index: 1, kind: input, shape index: {}]
  %s2 = inlined_call_operand.vmem [shape: f32[32,1], index: 2, kind: input, shape index: {}]
  %s3 = inlined_call_operand.hbm [shape: f32[2,32,256], index: 3, kind: output, shape index: {}]
  %s4 = sld [smem:[#allocation0]]
  $region49: #{tpu_custom_call.1} parent=0
    _
  %s6 = ssub.s32 1, %s4
  %s7 = scalar_select 0, %s6, %s4
  $region1: #{tpu_custom_call.1} parent=0
    #allocation2 [shape = 'u8[65536]{0}', space=vmem, size = 0x10000, scoped, tag = 'input window, operand 0']
    #allocation3 [shape = 's32[2]{0}', space=sflag, size = 0x8, scoped, tag = 'scoped memory for tpu_custom_call.1']
    #allocation4 [shape = 's32[2]{0}', space=sflag, size = 0x8, scoped, tag = 'scoped memory for tpu_custom_call.1']
    #allocation5 [shape = 'u8[65536]{0}', space=vmem, size = 0x10000, scoped, tag = 'output window, operand 0']
    %8 = vsyncpa [#allocation3], 0
    %s9 = scalar_lea.sflag [#allocation3], 1
    %10 = vsyncpa %s9, 0
    %11 = vsyncpa [#allocation4], 0
    %s12 = scalar_lea.sflag [#allocation4], 1
    %13 = vsyncpa %s12, 0
    loop: start=0, step=1, limit=4
    $region2: #{tpu_custom_call.1} parent=1 // loop_pre_header
      _
    $region3: #{tpu_custom_call.1} parent=1 // loop_header
      %s15 = sphi 0, %s19
      %p16 = scmp.ge.s32.totalorder %s15, 4
      %s22 = sphi 0, %s34
      %s23 = sphi 0, %s30
      %s24 = sphi 0, %s22
      %s25 = sphi 0, %s23
      %s26 = sphi 0, %s24
      %s27 = sphi 0, %s25
      %s39 = sphi 0, %s41
      %s42 = sphi 0, %s39
      %s43 = sphi 0, %s42
      %s59 = sphi 0, %s43
      %s63 = sphi 0, %s63
      %s65 = sphi 0, %s63
      %s66 = sphi 0, %s65
      %s80 = sphi 0, %s66
      %s84 = sphi 0, %s84
      %s86 = sphi 0, %s84
      %s87 = sphi 0, %s86
      %s101 = sphi 0, %s87
      %s109 = sphi 0, %s111
      %s112 = sphi 0, %s109
      %s113 = sphi 0, %s112
      %s129 = sphi 0, %s113
    $region4: #{tpu_custom_call.1} parent=1 // loop_header_branch
      %18 = sbr.rel (%p16) target = $region8
    $region5: #{tpu_custom_call.1} parent=1 // loop_body
      %s20 = ssub.s32 %s15, 1
      %s21 = ssub.s32 %s15, 2
      %s28 = sadd.s32 1, %s23
      %p29 = scmp.ge.s32.totalorder %s28, 1
      %s30 = scalar_select %p29, 0, %s28
      %s31 = sadd.s32 1, %s22
      %s32 = scalar_select %p29, %s31, %s22
      %p33 = scmp.ge.s32.totalorder %s32, 2
      %s34 = scalar_select %p33, 0, %s32
      %s35 = ssub.s32 %s22, %s34
      %s36 = ssub.s32 %s23, %s30
      %s37 = sor.u32 %s35, %s36
      %p38 = scmp.eq.s32.totalorder %s37, 0
      %s40 = sadd.s32 %s39, 1
      %s41 = scalar_select %p38, %s39, %s40
      %p44 = pneg %p38
      %p45 = scmp.eq.s32.totalorder %s15, 1
      %p46 = por %p44, %p45
      %p47 = scmp.ne.s32.totalorder %s39, %s42
      %p48 = scmp.eq.s32.totalorder %s15, 0
      %p49 = por %p47, %p48
      %p50 = scmp.ne.s32.totalorder %s39, %s42
      %p51 = scmp.eq.s32.totalorder %s20, 1
      %p52 = por %p50, %p51
      %p53 = scmp.ne.s32.totalorder %s42, %s43
      %p54 = scmp.eq.s32.totalorder %s20, 0
      %p55 = por %p53, %p54
      %p56 = scmp.ne.s32.totalorder %s42, %s43
      %p57 = scmp.eq.s32.totalorder %s21, 1
      %p58 = por %p56, %p57
      %p60 = scmp.ne.s32.totalorder %s43, %s59
      %p61 = scmp.eq.s32.totalorder %s21, 0
      %p62 = por %p60, %p61
      %s64 = sadd.s32 %s63, 1
      %p67 = scmp.eq.s32.totalorder %s15, 1
      %p68 = scmp.ne.s32.totalorder %s63, %s65
      %p69 = scmp.eq.s32.totalorder %s15, 0
      %p70 = por %p68, %p69
      %p71 = scmp.ne.s32.totalorder %s63, %s65
      %p72 = scmp.eq.s32.totalorder %s20, 1
      %p73 = por %p71, %p72
      %p74 = scmp.ne.s32.totalorder %s65, %s66
      %p75 = scmp.eq.s32.totalorder %s20, 0
      %p76 = por %p74, %p75
      %p77 = scmp.ne.s32.totalorder %s65, %s66
      %p78 = scmp.eq.s32.totalorder %s21, 1
      %p79 = por %p77, %p78
      %p81 = scmp.ne.s32.totalorder %s66, %s80
      %p82 = scmp.eq.s32.totalorder %s21, 0
      %p83 = por %p81, %p82
      %s85 = sadd.s32 %s84, 1
      %p88 = scmp.eq.s32.totalorder %s15, 1
      %p89 = scmp.ne.s32.totalorder %s84, %s86
      %p90 = scmp.eq.s32.totalorder %s15, 0
      %p91 = por %p89, %p90
      %p92 = scmp.ne.s32.totalorder %s84, %s86
      %p93 = scmp.eq.s32.totalorder %s20, 1
      %p94 = por %p92, %p93
      %p95 = scmp.ne.s32.totalorder %s86, %s87
      %p96 = scmp.eq.s32.totalorder %s20, 0
      %p97 = por %p95, %p96
      %p98 = scmp.ne.s32.totalorder %s86, %s87
      %p99 = scmp.eq.s32.totalorder %s21, 1
      %p100 = por %p98, %p99
      %p102 = scmp.ne.s32.totalorder %s87, %s101
      %p103 = scmp.eq.s32.totalorder %s21, 0
      %p104 = por %p102, %p103
      %s105 = ssub.s32 %s22, %s34
      %s106 = ssub.s32 %s23, %s30
      %s107 = sor.u32 %s105, %s106
      %p108 = scmp.eq.s32.totalorder %s107, 0
      %s110 = sadd.s32 %s109, 1
      %s111 = scalar_select %p108, %s109, %s110
      %p114 = pneg %p108
      %p115 = scmp.eq.s32.totalorder %s15, 1
      %p116 = por %p114, %p115
      %p117 = scmp.ne.s32.totalorder %s109, %s112
      %p118 = scmp.eq.s32.totalorder %s15, 0
      %p119 = por %p117, %p118
      %p120 = scmp.ne.s32.totalorder %s109, %s112
      %p121 = scmp.eq.s32.totalorder %s20, 1
      %p122 = por %p120, %p121
      %p123 = scmp.ne.s32.totalorder %s112, %s113
      %p124 = scmp.eq.s32.totalorder %s20, 0
      %p125 = por %p123, %p124
      %p126 = scmp.ne.s32.totalorder %s112, %s113
      %p127 = scmp.eq.s32.totalorder %s21, 1
      %p128 = por %p126, %p127
      %p130 = scmp.ne.s32.totalorder %s113, %s129
      %p131 = scmp.eq.s32.totalorder %s21, 0
      %p132 = por %p130, %p131
      %p133 = scmp.le.s32.totalorder 1, %s15
      %p134 = scmp.lt.s32.totalorder %s15, 3
      %p135 = pnand %p133, %p134
      %p136 = pneg %p135
      // Predicated region
      $region9: #{tpu_custom_call.1} parent=5 // pred_check
        _
      $region10: #{tpu_custom_call.1} parent=5 // pred_check_branch
        %138 = sbr.rel (%p135) target = $region12
      $region11: #{tpu_custom_call.1} parent=5 // pred_region
        %s139 = ssub.s32 %s15, 1
        // Predicated region
        $region13: #{tpu_custom_call.1} parent=11 // pred_check
          %p140 = pneg %p76
        $region14: #{tpu_custom_call.1} parent=11 // pred_check_branch
          %142 = sbr.rel (%p140) target = $region16
        $region15: #{tpu_custom_call.1} parent=11 // pred_region
          _
        $region16: #{tpu_custom_call.1} parent=11 // pred_fallthru
          _
        // Predicated region
        $region17: #{tpu_custom_call.1} parent=11 // pred_check
          %p143 = pneg %p97
        $region18: #{tpu_custom_call.1} parent=11 // pred_check_branch
          %145 = sbr.rel (%p143) target = $region20
        $region19: #{tpu_custom_call.1} parent=11 // pred_region
          _
        $region20: #{tpu_custom_call.1} parent=11 // pred_fallthru
          _
      $region12: #{tpu_custom_call.1} parent=5 // pred_fallthru
        _
      %p146 = scmp.lt.s32.totalorder %s15, 2
      // Predicated region
      $region21: #{tpu_custom_call.1} parent=5 // pred_check
        %p147 = pneg %p146
      $region22: #{tpu_custom_call.1} parent=5 // pred_check_branch
        %149 = sbr.rel (%p147) target = $region24
      $region23: #{tpu_custom_call.1} parent=5 // pred_region
        // Predicated region
        $region25: #{tpu_custom_call.1} parent=23 // pred_check
          %p150 = pneg %p49
        $region26: #{tpu_custom_call.1} parent=23 // pred_check_branch
          %152 = sbr.rel (%p150) target = $region28
        $region27: #{tpu_custom_call.1} parent=23 // pred_region
          %s153 = sand.u32 %s39, 1
          %s154 = scalar_lea.sflag [#allocation3], %s153
          %s155 = sand.u32 %s39, 1
          %s156 = smul.addr %s155, 64
          %s157 = scalar_lea.vmem [#allocation2], %s156
          %s158 = smul.u32 2, %s23
          %s160 = ssub.s32 1024, 1024
          %161 = vsyncadd %s154, %s160
          %s162 = smul.addr %s22, 8
          %s163 = sadd.s32 %s158, %s162
          %s164 = smul.addr %s163, 128
          %s165 = scalar_lea.hbm %s0, %s164
          %s166 = sshll.u32 %s157, 4
          %s167 = int_to_ptr.vmem [resolvable:$true] %s166
          %172 = dma.hbm_to_vmem [thread:$0]  %s165, 1024, %s167, %s154, 256, 256, 16
        $region28: #{tpu_custom_call.1} parent=23 // pred_fallthru
          _
      $region24: #{tpu_custom_call.1} parent=5 // pred_fallthru
        _
      %p173 = scmp.le.s32.totalorder 1, %s15
      %p174 = scmp.lt.s32.totalorder %s15, 3
      %p175 = pnand %p173, %p174
      %p176 = pneg %p175
      // Predicated region
      $region29: #{tpu_custom_call.1} parent=5 // pred_check
        _
      $region30: #{tpu_custom_call.1} parent=5 // pred_check_branch
        %178 = sbr.rel (%p175) target = $region32
      $region31: #{tpu_custom_call.1} parent=5 // pred_region
        %s179 = ssub.s32 %s15, 1
        %s180 = sand.u32 %s42, 1
        %s181 = scalar_lea.sflag [#allocation3], %s180
        %s182 = sand.u32 %s42, 1
        %s183 = smul.addr %s182, 64
        %s184 = scalar_lea.vmem [#allocation2], %s183
        // Predicated region
        $region33: #{tpu_custom_call.1} parent=31 // pred_check
          %p185 = pneg %p55
        $region34: #{tpu_custom_call.1} parent=31 // pred_check_branch
          %187 = sbr.rel (%p185) target = $region36
        $region35: #{tpu_custom_call.1} parent=31 // pred_region
          %188 = dma.done %s181, 1024
        $region36: #{tpu_custom_call.1} parent=31 // pred_fallthru
          _
        %s189 = sand.u32 %s42, 1
        %s190 = scalar_lea.sflag [#allocation3], %s189
        %s191 = sand.u32 %s42, 1
        %s192 = smul.addr %s191, 64
        %s193 = scalar_lea.vmem [#allocation2], %s192
        %p194 = pneg %p55
        %p195 = pneg %p52
        %p196 = pneg %p76
        %p197 = pneg %p73
        %p198 = pneg %p97
        %p199 = pneg %p94
        %p200 = pneg %p125
        %p201 = pneg %p122
        %s202 = sand.u32 %s112, 1
        %s203 = scalar_lea.sflag [#allocation4], %s202
        %s204 = sand.u32 %s112, 1
        %s205 = smul.addr %s204, 64
        %s206 = scalar_lea.vmem [#allocation5], %s205
        %s207 = smul.u32 2, %s25
        %s208 = smul.u32 2, %s25
        %v209 = vld [vmem:[%s1] sm:$0xff]
        %v210 = vld [vmem:[%s1 + $0x8] sm:$0xff]
        %v211 = vld [vmem:[%s1 + $0x10] sm:$0xff]
        %v212 = vld [vmem:[%s1 + $0x18] sm:$0xff]
        %v213 = vld [vmem:[%s2] sm:$0xff]
        %v214 = vld [vmem:[%s2 + $0x8] sm:$0xff]
        %v215 = vld [vmem:[%s2 + $0x10] sm:$0xff]
        %v216 = vld [vmem:[%s2 + $0x18] sm:$0xff]
        %v217 = vld [vmem:[%s184] sm:$0xff]
        %v218 = vld [vmem:[%s184 + $0x8] sm:$0xff]
        %v219 = vld [vmem:[%s184 + $0x10] sm:$0xff]
        %v220 = vld [vmem:[%s184 + $0x18] sm:$0xff]
        %v221 = vld [vmem:[%s184 + $0x20] sm:$0xff]
        %v222 = vld [vmem:[%s184 + $0x28] sm:$0xff]
        %v223 = vld [vmem:[%s184 + $0x30] sm:$0xff]
        %v224 = vld [vmem:[%s184 + $0x38] sm:$0xff]
        %v225 = vmul.f32 %v217, %v217
        %v226 = vmul.f32 %v218, %v218
        %v227 = vmul.f32 %v219, %v219
        %v228 = vmul.f32 %v220, %v220
        %v229 = vmul.f32 %v221, %v221
        %v230 = vmul.f32 %v222, %v222
        %v231 = vmul.f32 %v223, %v223
        %v232 = vmul.f32 %v224, %v224
        %v233 = vadd.f32 %v225, %v227
        %v234 = vadd.f32 %v233, %v229
        %v235 = vadd.f32 %v234, %v231
        %v236 = vrot.slane %v235, 4
        %v237 = vadd.f32 %v235, %v236
        %v238 = vrot.slane %v237, 2
        %v239 = vadd.f32 %v237, %v238
        %v240 = vrot.slane %v239, 1
        %v241 = vadd.f32 %v239, %v240
        %v242 = vadd.f32 %v226, %v228
        %v243 = vadd.f32 %v242, %v230
        %v244 = vadd.f32 %v243, %v232
        %v245 = vrot.slane %v244, 4
        %v246 = vadd.f32 %v244, %v245
        %v247 = vrot.slane %v246, 2
        %v248 = vadd.f32 %v246, %v247
        %v249 = vrot.slane %v248, 1
        %v250 = vadd.f32 %v248, %v249
        %v251 = vmax.f32 %v241, 1e-24
        %v252 = vmax.f32 %v250, 1e-24
        %v253 = vrsqrt.pop %v251
        %v254 = vrsqrt.pop %v252
        %vm255 = vcmask 261120
        %v257 = vsel %vm255, %v209, 0
        %v260 = vsel %vm255, %v210, 0
        %v263 = vsel %vm255, %v211, 0
        %v266 = vsel %vm255, %v212, 0
        %268 = vmatprep.subr.mxu0 0.0
        %269 = vmatpush1.msra.mxu0 0.0
        %270 = vmatprep.subr.mxu0 0.0
        %271 = vmatpush1.msra.mxu0 0.0
        %272 = vmatprep.subr.mxu0 0.0
        %273 = vmatpush1.msra.mxu0 0.0
        %274 = vmatprep.subr.mxu0 0.0
        %275 = vmatpush1.msra.mxu0 0.0
        %276 = vmatprep.subr.mxu0 0.0
        %277 = vmatpush1.msra.mxu0 0.0
        %278 = vmatprep.subr.mxu0 0.0
        %279 = vmatpush1.msra.mxu0 0.0
        %280 = vmatprep.subr.mxu0 0.0
        %281 = vmatpush1.msra.mxu0 0.0
        %282 = vmatprep.subr.mxu0 0.0
        %283 = vmatpush1.msra.mxu0 0.0
        %284 = vmatprep.subr.mxu0 0.0
        %285 = vmatpush1.msra.mxu0 0.0
        %286 = vmatprep.subr.mxu0 0.0
        %287 = vmatpush1.msra.mxu0 0.0
        %288 = vmatprep.subr.mxu0 0.0
        %289 = vmatpush1.msra.mxu0 0.0
        %290 = vmatprep.subr.mxu0 0.0
        %291 = vmatpush1.msra.mxu0 0.0
        %292 = vmatprep.subr.mxu0 %v224
        %293 = vmatpush1.msra.mxu0 %v223
        %294 = vmatprep.subr.mxu0 %v222
        %295 = vmatpush1.msra.mxu0 %v221
        %296 = vmatprep.subr.mxu0 %v220
        %297 = vmatpush1.msra.mxu0 %v219
        %298 = vmatprep.subr.mxu0 %v218
        %299 = vmatpush1.msra.mxu0 %v217
        %300 = vmatprep.subr.mxu0 0.0
        %301 = vmatpush2.msra.mxu0 0.0
        %302 = vmatprep.subr.mxu0 0.0
        %303 = vmatpush2.msra.mxu0 0.0
        %304 = vmatprep.subr.mxu0 0.0
        %305 = vmatpush2.msra.mxu0 0.0
        %306 = vmatprep.subr.mxu0 0.0
        %307 = vmatpush2.msra.mxu0 0.0
        %308 = vmatprep.subr.mxu0 0.0
        %309 = vmatpush2.msra.mxu0 0.0
        %310 = vmatprep.subr.mxu0 0.0
        %311 = vmatpush2.msra.mxu0 0.0
        %312 = vmatprep.subr.mxu0 0.0
        %313 = vmatpush2.msra.mxu0 0.0
        %314 = vmatprep.subr.mxu0 0.0
        %315 = vmatpush2.msra.mxu0 0.0
        %316 = vmatprep.subr.mxu0 0.0
        %317 = vmatpush2.msra.mxu0 0.0
        %318 = vmatprep.subr.mxu0 0.0
        %319 = vmatpush2.msra.mxu0 0.0
        %320 = vmatprep.subr.mxu0 0.0
        %321 = vmatpush2.msra.mxu0 0.0
        %322 = vmatprep.subr.mxu0 0.0
        %323 = vmatpush2.msra.mxu0 0.0
        %324 = vmatprep.subr.mxu0 0.0
        %325 = vmatpush2.msra.mxu0 0.0
        %326 = vmatprep.subr.mxu0 0.0
        %327 = vmatpush2.msra.mxu0 0.0
        %328 = vmatprep.subr.mxu0 0.0
        %329 = vmatpush2.msra.mxu0 0.0
        %330 = vmatprep.subr.mxu0 0.0
        %331 = vmatpush2.msra.mxu0 0.0
        %332 = vmatprep.mubr.f32.mxu0 0.0
        %333 = vmatmul.mubr.f32.gmra.mxu0 %v257
        %v334 = vpop.f32.mrf.mxu0
        %v335 = vadd.f32 0.0, %v334
        %v336 = vpop.f32.mrf.mxu0
        %v337 = vadd.f32 0.0, %v336
        %338 = vmatprep.mubr.f32.mxu0 0.0
        %339 = vmatmul.mubr.f32.gmra.mxu0 %v260
        %v340 = vpop.f32.mrf.mxu0
        %v341 = vadd.f32 0.0, %v340
        %v342 = vpop.f32.mrf.mxu0
        %v343 = vadd.f32 0.0, %v342
        %344 = vmatprep.mubr.f32.mxu0 0.0
        %345 = vmatmul.mubr.f32.gmra.mxu0 %v263
        %v346 = vpop.f32.mrf.mxu0
        %v347 = vadd.f32 0.0, %v346
        %v348 = vpop.f32.mrf.mxu0
        %v349 = vadd.f32 0.0, %v348
        %350 = vmatprep.mubr.f32.mxu0 0.0
        %351 = vmatmul.mubr.f32.gmra.mxu0 %v266
        %v352 = vpop.f32.mrf.mxu0
        %v353 = vadd.f32 0.0, %v352
        %v354 = vpop.f32.mrf.mxu0
        %v355 = vadd.f32 0.0, %v354
        %356 = vdwg.mxu0
        %v357 = vmul.f32 %v335, %v253
        %v358 = vmul.f32 %v337, %v254
        %v359 = vmul.f32 %v341, %v253
        %v360 = vmul.f32 %v343, %v254
        %v361 = vmul.f32 %v347, %v253
        %v362 = vmul.f32 %v349, %v254
        %v363 = vmul.f32 %v353, %v253
        %v364 = vmul.f32 %v355, %v254
        %366 = vset.pattern.permute.xlu0 0
        %367 = vperm.xlu0 %366, %v213
        %v368 = vpop.permute.xlu0 %367
        %371 = vset.pattern.permute.xlu0 0
        %372 = vperm.xlu0 %371, %v214
        %v373 = vpop.permute.xlu0 %372
        %376 = vset.pattern.permute.xlu0 0
        %377 = vperm.xlu0 %376, %v215
        %v378 = vpop.permute.xlu0 %377
        %381 = vset.pattern.permute.xlu0 0
        %382 = vperm.xlu0 %381, %v216
        %v383 = vpop.permute.xlu0 %382
        %v385 = vadd.f32 %v357, %v368
        %v386 = vadd.f32 %v358, %v368
        %v387 = vadd.f32 %v359, %v373
        %v388 = vadd.f32 %v360, %v373
        %v389 = vadd.f32 %v361, %v378
        %v390 = vadd.f32 %v362, %v378
        %v391 = vadd.f32 %v363, %v383
        %v392 = vadd.f32 %v364, %v383
        %393 = vst [vmem:[%s206] sm:$0xff] %v385
        %394 = vst [vmem:[%s206 + $0x8] sm:$0xff] %v386
        %395 = vst [vmem:[%s206 + $0x10] sm:$0xff] %v387
        %396 = vst [vmem:[%s206 + $0x18] sm:$0xff] %v388
        %397 = vst [vmem:[%s206 + $0x20] sm:$0xff] %v389
        %398 = vst [vmem:[%s206 + $0x28] sm:$0xff] %v390
        %399 = vst [vmem:[%s206 + $0x30] sm:$0xff] %v391
        %400 = vst [vmem:[%s206 + $0x38] sm:$0xff] %v392
        %s401 = sand.u32 %s112, 1
        %s402 = scalar_lea.sflag [#allocation4], %s401
        %s403 = sand.u32 %s112, 1
        %s404 = smul.addr %s403, 64
        %s405 = scalar_lea.vmem [#allocation5], %s404
        // Predicated region
        $region37: #{tpu_custom_call.1} parent=31 // pred_check
          %p406 = pneg %p122
        $region38: #{tpu_custom_call.1} parent=31 // pred_check_branch
          %408 = sbr.rel (%p406) target = $region40
        $region39: #{tpu_custom_call.1} parent=31 // pred_region
          %s409 = smul.u32 2, %s25
          %s411 = ssub.s32 1024, 1024
          %412 = vsyncadd %s402, %s411
          %s413 = smul.addr %s24, 8
          %s414 = sadd.s32 %s409, %s413
          %s415 = smul.addr %s414, 128
          %s416 = scalar_lea.hbm %s3, %s415
          %s417 = sshll.u32 %s405, 4
          %s418 = int_to_ptr.vmem [resolvable:$true] %s417
          %423 = dma.vmem_to_hbm [thread:$0]  %s418, 1024, %s416, %s402, 256, 256, 16
        $region40: #{tpu_custom_call.1} parent=31 // pred_fallthru
          _
      $region32: #{tpu_custom_call.1} parent=5 // pred_fallthru
        _
      %p424 = scmp.le.s32.totalorder 2, %s15
      // Predicated region
      $region41: #{tpu_custom_call.1} parent=5 // pred_check
        %p425 = pneg %p424
      $region42: #{tpu_custom_call.1} parent=5 // pred_check_branch
        %427 = sbr.rel (%p425) target = $region44
      $region43: #{tpu_custom_call.1} parent=5 // pred_region
        %s428 = ssub.s32 %s15, 2
        // Predicated region
        $region45: #{tpu_custom_call.1} parent=43 // pred_check
          %p429 = pneg %p128
        $region46: #{tpu_custom_call.1} parent=43 // pred_check_branch
          %431 = sbr.rel (%p429) target = $region48
        $region47: #{tpu_custom_call.1} parent=43 // pred_region
          %s432 = sand.u32 %s113, 1
          %s433 = scalar_lea.sflag [#allocation4], %s432
          %s434 = sand.u32 %s113, 1
          %s435 = smul.addr %s434, 64
          %s436 = scalar_lea.vmem [#allocation5], %s435
          %437 = dma.done %s433, 1024
        $region48: #{tpu_custom_call.1} parent=43 // pred_fallthru
          _
      $region44: #{tpu_custom_call.1} parent=5 // pred_fallthru
        _
    $region6: #{tpu_custom_call.1} parent=1 // loop_footer
      %s19 = sadd.s32 1, %s15
    $region7: #{tpu_custom_call.1} parent=1 // loop_footer_branch
      %14 = sbr.rel target = $region3
    $region8: #{tpu_custom_call.1} parent=1 // loop_exit
      _
    %438 = vsyncpa [#allocation3], 1
    %s439 = scalar_lea.sflag [#allocation3], 1
    %440 = vsyncpa %s439, 1
    %441 = vsyncpa [#allocation4], 1
    %s442 = scalar_lea.sflag [#allocation4], 1
    %443 = vsyncpa %s442, 1

</llo_original>
